<compile_context>
chip_gen: v5e
topology: v5e:2x2
jax: 0.10.0
libtpu: 0.0.40
codegen_flags: <defaults>
</compile_context>

<pallas_src>
import math
from functools import partial

import jax
import jax.numpy as jnp
from jax.experimental import pallas as pl
from jax.experimental.pallas import tpu as pltpu


def _round_up(x, n):
    return ((x + n - 1) // n) * n


def _pick_tile(dim, unit, max_tile, min_divisor):
    """Pick a tile size that never requires padding the operand in HBM.

    - dim <= max_tile                      -> full-extent block (layout-legal).
    - exact `unit`-multiple divisor of dim -> dense, unmasked stores, no tail.
    - otherwise                            -> max_tile with a cdiv grid; only
                                              the final block gets masked
                                              edge stores.
    """
    if dim <= max_tile:
        return dim
    t = (max_tile // unit) * unit
    while t >= min_divisor:
        if dim % t == 0:
            return t
        t -= unit
    return (max_tile // unit) * unit


def _arcface_kernel(label_ref, cos_ref, out_ref, *, cos_m, sin_m, sp, sn, tc):
    # cos_ref: (tb, tc) tile of logits;  label_ref: (tb, 1) int32 labels.
    j = pl.program_id(1)                                     # class-chunk idx
    cosine = jnp.clip(cos_ref[...].astype(jnp.float32), -1.0, 1.0)
    label = label_ref[...]                                   # (tb, 1)

    # Global column index for every lane in this chunk; one-hot mask of the
    # target logit.  Rows with label == -1 never match.  In ragged edge
    # blocks, out-of-bounds lanes have cols >= C > any real label, and
    # out-of-bounds rows are masked at store time, so garbage never lands.
    cols = j * tc + jax.lax.broadcasted_iota(jnp.int32, cosine.shape, 1)
    is_target = jnp.logical_and(cols == label, label != -1)

    # (tb,1) reduction + (tb,1) sqrt: lane reduce rides the XLU slot, sqrt the
    # EUP slot; both hidden under DMA.  Keep it this way (do not go full-tile).
    target_logit = jnp.sum(jnp.where(is_target, cosine, 0.0),
                           axis=1, keepdims=True)            # (tb, 1)
    sin_theta = jnp.sqrt(1.0 - target_logit * target_logit)  # safe: |t|<=1
    cos_theta_m = target_logit * cos_m - sin_theta * sin_m   # (tb, 1)

    modified = jnp.where(is_target, cos_theta_m * sp, cosine)
    out_ref[...] = (modified * sn).astype(out_ref.dtype)


def arcface_forward(cosine, label, *, sp=64.0, sn=64.0, m=0.5,
                    tb=None, tc=None, max_tb=256, max_tc=2048,
                    core_parallel_batch=False):
    """cosine: (B, C) float logits; label: (B,) int with -1 = ignore.

    Pass bf16 `cosine` to halve HBM traffic (compute stays f32 in-kernel).
    On v7x, consider max_tc=4096 and core_parallel_batch=True.
    Callers that can donate the logits buffer get true in-place operation
    (input_output_aliases={1: 0} is already declared on the pallas_call).
    """
    B, C = cosine.shape

    if tb is None:
        tb = _pick_tile(B, 16, max_tb, 64)
    else:
        tb = B if tb >= B else _round_up(tb, 16)
    if tc is None:
        tc = _pick_tile(C, 128, max_tc, 512)
    else:
        tc = C if tc >= C else _round_up(tc, 128)

    label2d = label.astype(jnp.int32).reshape(B, 1)
    grid = (pl.cdiv(B, tb), pl.cdiv(C, tc))

    # v7x: shard the batch axis across the 2 TensorCores.
    batch_sem = pltpu.CORE_PARALLEL if core_parallel_batch else "parallel"

    itemsize = jnp.dtype(cosine.dtype).itemsize
    cost = pl.CostEstimate(
        flops=6 * B * C,            # clip/cmp/where/mul over the tile
        transcendentals=B,          # one sqrt per row
        bytes_accessed=2 * B * C * itemsize + B * 4,
    )

    kernel = partial(
        _arcface_kernel,
        cos_m=math.cos(m),
        sin_m=math.sin(m),
        sp=sp / sn,                 # matches ArcFace.__init__: self.sp = sp / sn
        sn=sn,
        tc=tc,
    )

    return pl.pallas_call(
        kernel,
        out_shape=jax.ShapeDtypeStruct((B, C), cosine.dtype),
        grid=grid,
        in_specs=[
            # Labels: class-axis-invariant index_map -> stays resident across
            # the inner (class) grid axis, no redundant DMA.
            pl.BlockSpec((tb, 1), lambda i, j: (i, 0)),
            pl.BlockSpec((tb, tc), lambda i, j: (i, j)),
        ],
        out_specs=pl.BlockSpec((tb, tc), lambda i, j: (i, j)),
        # Output reuses the logits buffer (in-place, like the PyTorch module);
        # XLA copies defensively if the caller did not donate it.
        input_output_aliases={1: 0},
        compiler_params=pltpu.CompilerParams(
            dimension_semantics=(batch_sem, "parallel"),
            # Explicit, generation-safe budget (v5e default scoped VMEM is
            # only 16 MiB; blocks use ~8-16 MiB double-buffered).
            vmem_limit_bytes=32 * 1024 * 1024,
        ),
        cost_estimate=cost,
    )(label2d, cosine)


def arcface_ref(cosine, label, *, sp=64.0, sn=64.0, m=0.5):
    """Pure-JAX reference matching the PyTorch forward."""
    sp_eff = sp / sn
    cos = jnp.clip(cosine.astype(jnp.float32), -1.0, 1.0)
    cols = jnp.arange(cos.shape[1], dtype=jnp.int32)[None, :]
    lab = label.astype(jnp.int32)[:, None]
    is_target = (cols == lab) & (lab != -1)
    t = jnp.sum(jnp.where(is_target, cos, 0.0), axis=1, keepdims=True)
    sin_t = jnp.sqrt(1.0 - t * t)
    ctm = t * math.cos(m) - sin_t * math.sin(m)
    return (jnp.where(is_target, ctm * sp_eff, cos) * sn).astype(cosine.dtype)


if __name__ == "__main__":
    key = jax.random.PRNGKey(0)
    k1, k2, k3, k4, k5, k6, k7 = jax.random.split(key, 7)

    # --- test 1: small aligned shapes, single full-extent block, f32 --------
    B, C = 16, 128
    cosine = jax.random.uniform(k1, (B, C), jnp.float32, minval=-1.1, maxval=1.1)
    label = jax.random.randint(k2, (B,), 0, C, dtype=jnp.int32)
    label = jnp.where(jax.random.bernoulli(k3, 0.25, (B,)), jnp.int32(-1), label)
    ref = arcface_ref(cosine, label)
    out = jax.block_until_ready(arcface_forward(cosine, label))
    assert out.shape == (B, C) and out.dtype == jnp.float32
    assert jnp.allclose(out, ref, atol=1e-4, rtol=1e-4), "mismatch (test 1)"

    # --- test 2: ragged shapes + forced small tiles -> cdiv grid with masked
    # edge blocks on both axes and a multi-chunk class scatter; no padding ----
    B2, C2 = 24, 200
    cosine2 = jax.random.uniform(k4, (B2, C2), jnp.float32, minval=-1.1, maxval=1.1)
    label2 = jax.random.randint(k5, (B2,), 0, C2, dtype=jnp.int32)
    label2 = label2.at[0].set(-1).at[1].set(150)   # one ignored row, one target in chunk 1
    ref2 = arcface_ref(cosine2, label2)
    out2 = jax.block_until_ready(arcface_forward(cosine2, label2, tb=16, tc=128))
    assert out2.shape == (B2, C2)
    assert jnp.allclose(out2, ref2, atol=1e-4, rtol=1e-4), "mismatch (test 2)"

    # --- test 3: bf16 I/O (halves HBM bytes; in-kernel compute stays f32) ---
    B3, C3 = 32, 256
    cos3 = jax.random.uniform(k6, (B3, C3), jnp.float32,
                              minval=-1.1, maxval=1.1).astype(jnp.bfloat16)
    label3 = jax.random.randint(k7, (B3,), 0, C3, dtype=jnp.int32)
    ref3 = arcface_ref(cos3, label3)
    out3 = jax.block_until_ready(arcface_forward(cos3, label3))
    assert out3.dtype == jnp.bfloat16
    assert jnp.allclose(out3.astype(jnp.float32), ref3.astype(jnp.float32),
                        atol=0.75, rtol=2e-2), "mismatch (test 3)"

    print("KERNEL_OK")
</pallas_src>

<mosaic_0001>
module attributes {stable_mosaic.version = 11 : i64} {
  func.func @_arcface_kernel(%arg0: i32, %arg1: i32, %arg2: memref<16x1xi32, #tpu.memory_space<vmem>>, %arg3: memref<16x128xf32, #tpu.memory_space<vmem>>, %arg4: memref<16x128xf32, #tpu.memory_space<vmem>>) attributes {dimension_semantics = [#tpu.dimension_semantics<parallel>, #tpu.dimension_semantics<parallel>], iteration_bounds = array<i64: 1, 1>, scalar_prefetch = 0 : i64, scratch_operands = 0 : i64, tpu.core_type = #tpu.core_type<tc>, window_params = [{transform_indices = @transform_0, window_bounds = array<i64: 16, 1>}, {transform_indices = @transform_1, window_bounds = array<i64: 16, 128>}, {transform_indices = @transform_2, window_bounds = array<i64: 16, 128>}]} {
    %c0 = arith.constant 0 : index
    %c0_0 = arith.constant 0 : index
    %0 = vector.load %arg3[%c0, %c0_0] : memref<16x128xf32, #tpu.memory_space<vmem>>, vector<16x128xf32>
    %cst = arith.constant -1.000000e+00 : f32
    %cst_1 = arith.constant 1.000000e+00 : f32
    %1 = vector.broadcast %cst : f32 to vector<16x128xf32>
    %2 = arith.maximumf %1, %0 : vector<16x128xf32>
    %3 = vector.broadcast %cst_1 : f32 to vector<16x128xf32>
    %4 = arith.minimumf %3, %2 : vector<16x128xf32>
    %c0_2 = arith.constant 0 : index
    %c0_3 = arith.constant 0 : index
    %5 = vector.load %arg2[%c0_2, %c0_3] : memref<16x1xi32, #tpu.memory_space<vmem>>, vector<16x1xi32>
    %c128_i32 = arith.constant 128 : i32
    %6 = arith.muli %arg1, %c128_i32 : i32
    %7 = tpu.iota {dimensions = array<i32: 1>} : vector<16x128xi32>
    %8 = vector.broadcast %6 : i32 to vector<16x128xi32>
    %9 = arith.addi %8, %7 : vector<16x128xi32>
    %10 = vector.broadcast %5 : vector<16x1xi32> to vector<16x128xi32>
    %11 = arith.cmpi eq, %9, %10 : vector<16x128xi32>
    %c-1_i32 = arith.constant -1 : i32
    %12 = vector.broadcast %c-1_i32 : i32 to vector<16x1xi32>
    %13 = arith.cmpi ne, %5, %12 : vector<16x1xi32>
    %14 = vector.broadcast %13 : vector<16x1xi1> to vector<16x128xi1>
    %15 = arith.andi %11, %14 : vector<16x128xi1>
    %cst_4 = arith.constant 0.000000e+00 : f32
    %16 = vector.broadcast %cst_4 : f32 to vector<16x128xf32>
    %17 = arith.select %15, %4, %16 : vector<16x128xi1>, vector<16x128xf32>
    %cst_5 = arith.constant dense<0.000000e+00> : vector<16xf32>
    %18 = vector.multi_reduction <add>, %17, %cst_5 [1] : vector<16x128xf32> to vector<16xf32>
    %19 = vector.shape_cast %18 : vector<16xf32> to vector<16x1xf32>
    %20 = arith.mulf %19, %19 : vector<16x1xf32>
    %cst_6 = arith.constant 1.000000e+00 : f32
    %21 = vector.broadcast %cst_6 : f32 to vector<16x1xf32>
    %22 = arith.subf %21, %20 : vector<16x1xf32>
    %23 = math.sqrt %22 : vector<16x1xf32>
    %cst_7 = arith.constant 0.87758255 : f32
    %24 = vector.broadcast %cst_7 : f32 to vector<16x1xf32>
    %25 = arith.mulf %19, %24 : vector<16x1xf32>
    %cst_8 = arith.constant 0.47942555 : f32
    %26 = vector.broadcast %cst_8 : f32 to vector<16x1xf32>
    %27 = arith.mulf %23, %26 : vector<16x1xf32>
    %28 = arith.subf %25, %27 : vector<16x1xf32>
    %cst_9 = arith.constant 1.000000e+00 : f32
    %29 = vector.broadcast %cst_9 : f32 to vector<16x1xf32>
    %30 = arith.mulf %28, %29 : vector<16x1xf32>
    %31 = vector.shape_cast %30 : vector<16x1xf32> to vector<16x1xf32>
    %32 = vector.broadcast %31 : vector<16x1xf32> to vector<16x128xf32>
    %33 = arith.select %15, %32, %4 : vector<16x128xi1>, vector<16x128xf32>
    %cst_10 = arith.constant 6.400000e+01 : f32
    %34 = vector.broadcast %cst_10 : f32 to vector<16x128xf32>
    %35 = arith.mulf %33, %34 : vector<16x128xf32>
    %c0_11 = arith.constant 0 : index
    %c0_12 = arith.constant 0 : index
    %36 = vector.load %arg4[%c0_11, %c0_12] : memref<16x128xf32, #tpu.memory_space<vmem>>, vector<16x128xf32>
    tpu.vector_store %arg4[%c0_11, %c0_12], %35 {strides = array<i32>} : memref<16x128xf32, #tpu.memory_space<vmem>>, vector<16x128xf32>,
    return
  }
  func.func @transform_0(%arg0: i32, %arg1: i32) -> (i32, i32) {
    %c0_i32 = arith.constant 0 : i32
    %c0_i32_0 = arith.constant 0 : i32
    return %arg0, %c0_i32 : i32, i32
  }
  func.func @transform_1(%arg0: i32, %arg1: i32) -> (i32, i32) {
    %c0_i32 = arith.constant 0 : i32
    return %arg0, %arg1 : i32, i32
  }
  func.func @transform_2(%arg0: i32, %arg1: i32) -> (i32, i32) {
    %c0_i32 = arith.constant 0 : i32
    return %arg0, %arg1 : i32, i32
  }
}

</mosaic_0001>

<llo_original>
// kernel: tpu_custom_call.1
$region0: #{tpu_custom_call.1}
  #allocation0 [shape = 'u32[]', space=smem, size = 0x4, offset = 0x4, fixed_abs, tag = 'smem constant byte address 0x4 - core index']
  #allocation1 [shape = 'u32[72,128]{1,0:T(1,128)}', space=vmem, size = 0x9000, scoped, tag = 'internal scratch']
  %s0 = inlined_call_operand.vmem [shape: s32[16,1], index: 0, kind: input, shape index: {}]
  %s1 = inlined_call_operand.hbm [shape: f32[16,128], index: 1, kind: input, shape index: {}, may-alias: {1,2}]
  %s2 = inlined_call_operand.hbm [shape: f32[16,128], index: 2, kind: output, shape index: {}, may-alias: {1,2}]
  %s3 = sld [smem:[#allocation0]]
  $region22: #{tpu_custom_call.1} parent=0
    _
  %s5 = ssub.s32 1, %s3
  %s6 = scalar_select 0, %s5, %s3
  $region1: #{tpu_custom_call.1} parent=0
    #allocation2 [shape = 'u8[8192]{0}', space=vmem, size = 0x2000, scoped, tag = 'input window, operand 1, single buffered']
    #allocation3 [shape = 's32[1]{0}', space=sflag, size = 0x4, scoped, tag = 'scoped memory for tpu_custom_call.1']
    #allocation4 [shape = 's32[1]{0}', space=sflag, size = 0x4, scoped, tag = 'scoped memory for tpu_custom_call.1']
    #allocation5 [shape = 'u8[8192]{0}', space=vmem, size = 0x2000, scoped, tag = 'output window, operand 0, single buffered']
    %7 = vsyncpa [#allocation3], 0
    %8 = vsyncpa [#allocation4], 0
    // Predicated region
    $region2: #{tpu_custom_call.1} parent=1 // pred_check
      _
    $region3: #{tpu_custom_call.1} parent=1 // pred_check_branch
      %10 = sbr.rel (0) target = $region5
    $region4: #{tpu_custom_call.1} parent=1 // pred_region
      _
    $region5: #{tpu_custom_call.1} parent=1 // pred_fallthru
      _
    // Predicated region
    $region6: #{tpu_custom_call.1} parent=1 // pred_check
      _
    $region7: #{tpu_custom_call.1} parent=1 // pred_check_branch
      %12 = sbr.rel (0) target = $region9
    $region8: #{tpu_custom_call.1} parent=1 // pred_region
      %14 = vsyncadd [#allocation3], 0
      %s15 = sshll.u32 %s1, 4
      %s16 = int_to_ptr.hbm [resolvable:$true] %s15
      %s17 = sshll.u32 [#allocation2], 4
      %s18 = int_to_ptr.vmem [resolvable:$true] %s17
      %23 = dma.hbm_to_vmem [thread:$0]  %s16, 256, %s18, [#allocation3], 128, 128, 8
    $region9: #{tpu_custom_call.1} parent=1 // pred_fallthru
      _
    // Predicated region
    $region10: #{tpu_custom_call.1} parent=1 // pred_check
      _
    $region11: #{tpu_custom_call.1} parent=1 // pred_check_branch
      %25 = sbr.rel (0) target = $region13
    $region12: #{tpu_custom_call.1} parent=1 // pred_region
      %27 = dma.done [#allocation3], 256
    $region13: #{tpu_custom_call.1} parent=1 // pred_fallthru
      _
    %v28 = vld [vmem:[#allocation2] sm:$0xff]
    %v29 = vld [vmem:[#allocation2 + $0x8] sm:$0xff]
    %v30 = vmax.f32 %v28, -1.0
    %v31 = vmax.f32 %v29, -1.0
    %v32 = vmin.f32 %v30, 1.0
    %v33 = vmin.f32 %v31, 1.0
    %v34 = vld [vmem:[%s0] sm:$0xff]
    %v35 = vld [vmem:[%s0 + $0x8] sm:$0xff]
    %s36 = smul.u32 0, 128
    %v37 = vlaneseq
    %v38 = vand.u32 %v37, 127
    %v39 = vstv %s36
    %v40 = vadd.s32 %v39, %v38
    %41 = vset.pattern.permute.xlu0 0
    %42 = vperm.xlu0 %41, %v34
    %v43 = vpop.permute.xlu0 %42
    %44 = vset.pattern.permute.xlu0 0
    %45 = vperm.xlu0 %44, %v35
    %v46 = vpop.permute.xlu0 %45
    %vm47 = vcmp.eq.s32.totalorder %v40, %v43
    %vm48 = vcmp.eq.s32.totalorder %v40, %v46
    %vm49 = vcmp.ne.s32.totalorder %v34, 4294967295
    %vm50 = vcmp.ne.s32.totalorder %v35, 4294967295
    %v51 = vsel %vm49, 1, 0
    %v52 = vsel %vm50, 1, 0
    %53 = vset.pattern.permute.xlu0 0
    %54 = vperm.xlu0 %53, %v51
    %v55 = vpop.permute.xlu0 %54
    %56 = vset.pattern.permute.xlu0 0
    %57 = vperm.xlu0 %56, %v52
    %v58 = vpop.permute.xlu0 %57
    %vm59 = vcmp.eq.s32.totalorder %v55, 1
    %vm60 = vcmp.eq.s32.totalorder %v58, 1
    %vm61 = vmand %vm47, %vm59
    %vm62 = vmand %vm48, %vm60
    %v63 = vsel %vm61, %v32, 0.0
    %v64 = vsel %vm62, %v33, 0.0
    %65 = vadd.xlane.f32.xlu0 %v63
    %v66 = vpop.xlane.xlu0 %65
    %67 = vadd.xlane.f32.xlu0 %v64
    %v68 = vpop.xlane.xlu0 %67
    %v69 = vmul.f32 %v66, %v66
    %v70 = vmul.f32 %v68, %v68
    %v71 = vsub.f32 1.0, %v69
    %v72 = vsub.f32 1.0, %v70
    %v73 = vrsqrt.pop %v71
    %v74 = vmul.f32 %v73, %v71
    %v75 = vmul.f32 %v74, %v73
    %v76 = vmul.f32 0.5, %v75
    %v77 = vsub.f32 1.5, %v76
    %v78 = vmul.f32 %v73, %v77
    %v79 = vmul.f32 %v71, %v78
    %vm80 = vcmp.eq.f32.partialorder %v71, inf
    %v81 = vsel %vm80, %v71, %v79
    %vm82 = vcmp.eq.f32.partialorder %v71, 0.0
    %v83 = vand.u32 %v71, 2147483648
    %v84 = vsel %vm82, %v83, %v81
    %v85 = vrsqrt.pop %v72
    %v86 = vmul.f32 %v85, %v72
    %v87 = vmul.f32 %v86, %v85
    %v88 = vmul.f32 0.5, %v87
    %v89 = vsub.f32 1.5, %v88
    %v90 = vmul.f32 %v85, %v89
    %v91 = vmul.f32 %v72, %v90
    %vm92 = vcmp.eq.f32.partialorder %v72, inf
    %v93 = vsel %vm92, %v72, %v91
    %vm94 = vcmp.eq.f32.partialorder %v72, 0.0
    %v95 = vand.u32 %v72, 2147483648
    %v96 = vsel %vm94, %v95, %v93
    %v97 = vmul.f32 %v66, 0.87758255
    %v98 = vmul.f32 %v68, 0.87758255
    %v99 = vmul.f32 %v84, 0.47942555
    %v100 = vmul.f32 %v96, 0.47942555
    %v101 = vsub.f32 %v97, %v99
    %v102 = vsub.f32 %v98, %v100
    %v103 = vsel %vm61, %v101, %v32
    %v104 = vsel %vm62, %v102, %v33
    %v105 = vmul.f32 %v103, 64.0
    %v106 = vmul.f32 %v104, 64.0
    %107 = vst [vmem:[#allocation5] sm:$0xff] %v105
    %108 = vst [vmem:[#allocation5 + $0x8] sm:$0xff] %v106
    // Predicated region
    $region14: #{tpu_custom_call.1} parent=1 // pred_check
      _
    $region15: #{tpu_custom_call.1} parent=1 // pred_check_branch
      %110 = sbr.rel (0) target = $region17
    $region16: #{tpu_custom_call.1} parent=1 // pred_region
      %112 = vsyncadd [#allocation4], 0
      %s113 = sshll.u32 [#allocation5], 4
      %s114 = int_to_ptr.vmem [resolvable:$true] %s113
      %s115 = sshll.u32 %s2, 4
      %s116 = int_to_ptr.hbm [resolvable:$true] %s115
      %121 = dma.vmem_to_hbm [thread:$0]  %s114, 256, %s116, [#allocation4], 128, 128, 8
    $region17: #{tpu_custom_call.1} parent=1 // pred_fallthru
      _
    // Predicated region
    $region18: #{tpu_custom_call.1} parent=1 // pred_check
      _
    $region19: #{tpu_custom_call.1} parent=1 // pred_check_branch
      %123 = sbr.rel (0) target = $region21
    $region20: #{tpu_custom_call.1} parent=1 // pred_region
      %125 = dma.done [#allocation4], 256
    $region21: #{tpu_custom_call.1} parent=1 // pred_fallthru
      _
    %126 = vsyncpa [#allocation3], 1
    %127 = vsyncpa [#allocation4], 1

</llo_original>
